<compile_context>
chip_gen: v6e
topology: v6e:2x2x1
jax: 0.10.0
libtpu: 0.0.40
codegen_flags: <defaults>
</compile_context>

<pallas_src>
import functools

import jax
import jax.numpy as jnp
from jax.experimental import pallas as pl
from jax.experimental.pallas import tpu as pltpu


def _round_up(x, m):
    return ((x + m - 1) // m) * m


def highway_kernel(x_ref, w_ref, b_ref, o_ref, *, dpad):
    x = x_ref[...]                                               # [TM, Dpad]
    # One fused MXU matmul for both branches: z = x @ [Wp | Wg] + [bp | bg]
    z = jnp.dot(x, w_ref[...], preferred_element_type=jnp.float32) + b_ref[...]
    proj = jnp.maximum(z[:, :dpad], 0.0)                         # ReLU(x @ Wp + bp)
    gate = jax.nn.sigmoid(z[:, dpad:])                           # sigmoid(x @ Wg + bg)
    xf = x.astype(jnp.float32)
    # highway combine:  proj*g + x*(1-g)  ==  x + g*(proj - x)
    o_ref[...] = (xf + gate * (proj - xf)).astype(o_ref.dtype)


@functools.partial(jax.jit, static_argnames=("tm_target", "vmem_budget_bytes"))
def highway(x, w_proj, b_proj, w_gate, b_gate, *, tm_target=512,
            vmem_budget_bytes=32 * 1024 * 1024):
    """x: [M, D]; w_*: [D, D] (laid out so kernel does x @ W); b_*: [D]."""
    M, Din = x.shape
    Dout = w_proj.shape[1]
    assert Din == Dout, "Highway residual mix requires in_dim == out_dim"
    D = Din
    dpad = _round_up(D, 128)
    itemsize = jnp.dtype(x.dtype).itemsize

    # --- choose an M tile that fits the VMEM budget on every generation ---
    m_pad8 = _round_up(M, 8)
    tm = max(8, _round_up(min(tm_target, m_pad8), 8))

    def _vmem_estimate(t):
        io_bufs = 2 * 2 * t * dpad * itemsize                   # x + out, double buffered
        w_bufs = 2 * (dpad * 2 * dpad + 2 * dpad) * itemsize    # fused W + bias, dbl buf
        z_tmp = t * 2 * dpad * 4                                 # f32 matmul result
        return io_bufs + w_bufs + z_tmp

    while tm > 8 and _vmem_estimate(tm) > vmem_budget_bytes:
        tm = max(8, ((tm // 2) // 8) * 8)

    m_pad = _round_up(M, tm)
    grid = (m_pad // tm,)

    # --- pad to lane-dense feature dims and fuse proj|gate parameters ---
    x_p = jnp.pad(x, ((0, m_pad - M), (0, dpad - D)))
    wp = jnp.pad(w_proj.astype(x.dtype), ((0, dpad - D), (0, dpad - D)))
    wg = jnp.pad(w_gate.astype(x.dtype), ((0, dpad - D), (0, dpad - D)))
    bp = jnp.pad(b_proj.reshape(-1).astype(jnp.float32), (0, dpad - D))
    bg = jnp.pad(b_gate.reshape(-1).astype(jnp.float32), (0, dpad - D))
    w_fused = jnp.concatenate([wp, wg], axis=1)                  # [Dpad, 2*Dpad]
    b_fused = jnp.concatenate([bp, bg]).reshape(1, 2 * dpad)     # [1, 2*Dpad], f32

    out_p = pl.pallas_call(
        functools.partial(highway_kernel, dpad=dpad),
        out_shape=jax.ShapeDtypeStruct((m_pad, dpad), x.dtype),
        grid_spec=pltpu.PrefetchScalarGridSpec(
            num_scalar_prefetch=0,
            grid=grid,
            in_specs=[
                pl.BlockSpec((tm, dpad), lambda i: (i, 0)),           # x tile
                pl.BlockSpec((dpad, 2 * dpad), lambda i: (0, 0)),     # fused weights (resident)
                pl.BlockSpec((1, 2 * dpad), lambda i: (0, 0)),        # fused bias (resident)
            ],
            out_specs=pl.BlockSpec((tm, dpad), lambda i: (i, 0)),
        ),
        compiler_params=pltpu.CompilerParams(
            dimension_semantics=("parallel",),           # shard M across TCs on v7x
            vmem_limit_bytes=48 << 20,                    # headroom on v7x (64 MiB physical)
        ),
    )(x_p, w_fused, b_fused)

    return out_p[:M, :D]


def highway_ref(x, w_proj, b_proj, w_gate, b_gate):
    proj = jnp.maximum(x @ w_proj + b_proj, 0.0)
    gate = jax.nn.sigmoid(x @ w_gate + b_gate)
    return proj * gate + x * (1.0 - gate)


if __name__ == "__main__":
    # Module config: Highway(in_dim=32, out_dim=32); activations [batch, seq, hidden].
    in_dim = out_dim = 32
    batch, seq = 2, 8

    key = jax.random.PRNGKey(0)
    k_x, k_wp, k_wg = jax.random.split(key, 3)

    # nn.Linear-style uniform init; biases per __init__: proj.bias = 0, gate.bias = -1.
    bound = 1.0 / (in_dim ** 0.5)
    w_proj = jax.random.uniform(k_wp, (in_dim, out_dim), jnp.float32, -bound, bound)
    w_gate = jax.random.uniform(k_wg, (in_dim, out_dim), jnp.float32, -bound, bound)
    b_proj = jnp.zeros((out_dim,), jnp.float32)
    b_gate = jnp.full((out_dim,), -1.0, jnp.float32)

    x = jax.random.normal(k_x, (batch, seq, in_dim), jnp.float32)
    x2d = x.reshape(batch * seq, in_dim)                   # [M, D] layout for the kernel

    out2d = highway(x2d, w_proj, b_proj, w_gate, b_gate)
    out = out2d.reshape(batch, seq, out_dim)
    jax.block_until_ready(out)

    ref = highway_ref(x2d, w_proj, b_proj, w_gate, b_gate).reshape(batch, seq, out_dim)
    assert jnp.allclose(out, ref, atol=1e-5, rtol=1e-5), "mismatch vs reference"

    print("KERNEL_OK")
</pallas_src>

<mosaic_0001>
module attributes {stable_mosaic.version = 11 : i64} {
  func.func @highway_kernel(%arg0: i32, %arg1: memref<16x128xf32, #tpu.memory_space<vmem>>, %arg2: memref<128x256xf32, #tpu.memory_space<vmem>>, %arg3: memref<1x256xf32, #tpu.memory_space<vmem>>, %arg4: memref<16x128xf32, #tpu.memory_space<vmem>>) attributes {dimension_semantics = [#tpu.dimension_semantics<parallel>], iteration_bounds = array<i64: 1>, scalar_prefetch = 0 : i64, scratch_operands = 0 : i64, tpu.core_type = #tpu.core_type<tc>, window_params = [{transform_indices = @transform_0, window_bounds = array<i64: 16, 128>}, {pipeline_mode = #tpu.pipeline_mode<synchronous>, transform_indices = @transform_1, window_bounds = array<i64: 128, 256>}, {pipeline_mode = #tpu.pipeline_mode<synchronous>, transform_indices = @transform_2, window_bounds = array<i64: 1, 256>}, {transform_indices = @transform_3, window_bounds = array<i64: 16, 128>}]} {
    %c0 = arith.constant 0 : index
    %c0_0 = arith.constant 0 : index
    %0 = vector.load %arg1[%c0, %c0_0] : memref<16x128xf32, #tpu.memory_space<vmem>>, vector<16x128xf32>
    %c0_1 = arith.constant 0 : index
    %c0_2 = arith.constant 0 : index
    %1 = vector.load %arg2[%c0_1, %c0_2] : memref<128x256xf32, #tpu.memory_space<vmem>>, vector<128x256xf32>
    %cst = arith.constant dense<0.000000e+00> : vector<16x256xf32>
    %2 = tpu.matmul %0, %1, %cst {dimension_numbers = #tpu.dot_dimension_numbers<[1], [0], [0], [1], [0, 0, 1, 1], [], []>} : vector<16x128xf32>, vector<128x256xf32>, vector<16x256xf32> -> vector<16x256xf32>
    %c0_3 = arith.constant 0 : index
    %c0_4 = arith.constant 0 : index
    %3 = vector.load %arg3[%c0_3, %c0_4] : memref<1x256xf32, #tpu.memory_space<vmem>>, vector<1x256xf32>
    %4 = vector.broadcast %3 : vector<1x256xf32> to vector<16x256xf32>
    %5 = arith.addf %2, %4 : vector<16x256xf32>
    %6 = vector.extract_strided_slice %5 {offsets = [0, 0], sizes = [16, 128], strides = [1, 1]} : vector<16x256xf32> to vector<16x128xf32>
    %cst_5 = arith.constant 0.000000e+00 : f32
    %7 = vector.broadcast %cst_5 : f32 to vector<16x128xf32>
    %8 = arith.maximumf %6, %7 : vector<16x128xf32>
    %9 = vector.extract_strided_slice %5 {offsets = [0, 128], sizes = [16, 128], strides = [1, 1]} : vector<16x256xf32> to vector<16x128xf32>
    %10 = arith.negf %9 : vector<16x128xf32>
    %11 = math.exp %10 : vector<16x128xf32>
    %cst_6 = arith.constant 1.000000e+00 : f32
    %12 = vector.broadcast %cst_6 : f32 to vector<16x128xf32>
    %13 = arith.addf %12, %11 : vector<16x128xf32>
    %14 = arith.divf %12, %13 : vector<16x128xf32>
    %15 = arith.subf %8, %0 : vector<16x128xf32>
    %16 = arith.mulf %14, %15 : vector<16x128xf32>
    %17 = arith.addf %0, %16 : vector<16x128xf32>
    %c0_7 = arith.constant 0 : index
    %c0_8 = arith.constant 0 : index
    %18 = vector.load %arg4[%c0_7, %c0_8] : memref<16x128xf32, #tpu.memory_space<vmem>>, vector<16x128xf32>
    tpu.vector_store %arg4[%c0_7, %c0_8], %17 {strides = array<i32>} : memref<16x128xf32, #tpu.memory_space<vmem>>, vector<16x128xf32>,
    return
  }
  func.func @transform_0(%arg0: i32) -> (i32, i32) {
    %c0_i32 = arith.constant 0 : i32
    %c0_i32_0 = arith.constant 0 : i32
    return %arg0, %c0_i32 : i32, i32
  }
  func.func @transform_1(%arg0: i32) -> (i32, i32) {
    %c0_i32 = arith.constant 0 : i32
    %c0_i32_0 = arith.constant 0 : i32
    %c0_i32_1 = arith.constant 0 : i32
    return %c0_i32, %c0_i32_0 : i32, i32
  }
  func.func @transform_2(%arg0: i32) -> (i32, i32) {
    %c0_i32 = arith.constant 0 : i32
    %c0_i32_0 = arith.constant 0 : i32
    %c0_i32_1 = arith.constant 0 : i32
    return %c0_i32, %c0_i32_0 : i32, i32
  }
  func.func @transform_3(%arg0: i32) -> (i32, i32) {
    %c0_i32 = arith.constant 0 : i32
    %c0_i32_0 = arith.constant 0 : i32
    return %arg0, %c0_i32 : i32, i32
  }
}

</mosaic_0001>

<llo_original>
// kernel: highway.1
$region0: #{highway.1}
  #allocation0 [shape = 'u32[]', space=smem, size = 0x4, offset = 0x4, fixed_abs, tag = 'smem constant byte address 0x4 - core index']
  #allocation1 [shape = 'u32[144,128]{1,0:T(1,128)}', space=vmem, size = 0x12000, scoped, tag = 'internal scratch']
  %s0 = inlined_call_operand.vmem [shape: f32[16,128], index: 0, kind: input, shape index: {}]
  %s1 = inlined_call_operand.vmem [shape: f32[128,256], index: 1, kind: input, shape index: {}]
  %s2 = inlined_call_operand.vmem [shape: f32[1,256], index: 2, kind: input, shape index: {}]
  %s3 = inlined_call_operand.hbm [shape: f32[16,128], index: 3, kind: output, shape index: {}]
  %s4 = sld [smem:[#allocation0]]
  $region22: #{highway.1} parent=0
    _
  %s6 = ssub.s32 1, %s4
  %s7 = scalar_select 0, %s6, %s4
  $region1: #{highway.1} parent=0
    #allocation2 [shape = 'u8[8192]{0}', space=vmem, size = 0x2000, scoped, tag = 'output window, operand 0, single buffered']
    #allocation3 [shape = 's32[1]{0}', space=sflag, size = 0x4, scoped, tag = 'scoped memory for highway.1']
    %8 = vsyncpa [#allocation3], 0
    // Predicated region
    $region2: #{highway.1} parent=1 // pred_check
      _
    $region3: #{highway.1} parent=1 // pred_check_branch
      %10 = sbr.rel (0) target = $region5
    $region4: #{highway.1} parent=1 // pred_region
      _
    $region5: #{highway.1} parent=1 // pred_fallthru
      _
    // Predicated region
    $region6: #{highway.1} parent=1 // pred_check
      _
    $region7: #{highway.1} parent=1 // pred_check_branch
      %12 = sbr.rel (0) target = $region9
    $region8: #{highway.1} parent=1 // pred_region
      _
    $region9: #{highway.1} parent=1 // pred_fallthru
      _
    // Predicated region
    $region10: #{highway.1} parent=1 // pred_check
      _
    $region11: #{highway.1} parent=1 // pred_check_branch
      %14 = sbr.rel (0) target = $region13
    $region12: #{highway.1} parent=1 // pred_region
      _
    $region13: #{highway.1} parent=1 // pred_fallthru
      _
    %v15 = vld [vmem:[%s0] sm:$0xff]
    %v16 = vld [vmem:[%s0 + $0x8] sm:$0xff]
    %v17 = vld [vmem:[%s1] sm:$0xff]
    %v18 = vld [vmem:[%s1 + $0x8] sm:$0xff]
    %v19 = vld [vmem:[%s1 + $0x10] sm:$0xff]
    %v20 = vld [vmem:[%s1 + $0x18] sm:$0xff]
    %v21 = vld [vmem:[%s1 + $0x20] sm:$0xff]
    %v22 = vld [vmem:[%s1 + $0x28] sm:$0xff]
    %v23 = vld [vmem:[%s1 + $0x30] sm:$0xff]
    %v24 = vld [vmem:[%s1 + $0x38] sm:$0xff]
    %v25 = vld [vmem:[%s1 + $0x40] sm:$0xff]
    %v26 = vld [vmem:[%s1 + $0x48] sm:$0xff]
    %v27 = vld [vmem:[%s1 + $0x50] sm:$0xff]
    %v28 = vld [vmem:[%s1 + $0x58] sm:$0xff]
    %v29 = vld [vmem:[%s1 + $0x60] sm:$0xff]
    %v30 = vld [vmem:[%s1 + $0x68] sm:$0xff]
    %v31 = vld [vmem:[%s1 + $0x70] sm:$0xff]
    %v32 = vld [vmem:[%s1 + $0x78] sm:$0xff]
    %v33 = vld [vmem:[%s1 + $0x80] sm:$0xff]
    %v34 = vld [vmem:[%s1 + $0x88] sm:$0xff]
    %v35 = vld [vmem:[%s1 + $0x90] sm:$0xff]
    %v36 = vld [vmem:[%s1 + $0x98] sm:$0xff]
    %v37 = vld [vmem:[%s1 + $0xa0] sm:$0xff]
    %v38 = vld [vmem:[%s1 + $0xa8] sm:$0xff]
    %v39 = vld [vmem:[%s1 + $0xb0] sm:$0xff]
    %v40 = vld [vmem:[%s1 + $0xb8] sm:$0xff]
    %v41 = vld [vmem:[%s1 + $0xc0] sm:$0xff]
    %v42 = vld [vmem:[%s1 + $0xc8] sm:$0xff]
    %v43 = vld [vmem:[%s1 + $0xd0] sm:$0xff]
    %v44 = vld [vmem:[%s1 + $0xd8] sm:$0xff]
    %v45 = vld [vmem:[%s1 + $0xe0] sm:$0xff]
    %v46 = vld [vmem:[%s1 + $0xe8] sm:$0xff]
    %v47 = vld [vmem:[%s1 + $0xf0] sm:$0xff]
    %v48 = vld [vmem:[%s1 + $0xf8] sm:$0xff]
    %v49 = vld [vmem:[%s2] sm:$0x3]
    %v51 = vlaneseq
    %v52 = vshrl.u32 %v51, 7
    %v53 = vsub.s32 0, %v52
    %v54 = vrot.slane %v49, %v53
    %v55 = vlaneseq
    %v56 = vshrl.u32 %v55, 7
    %v57 = vsub.s32 1, %v56
    %v58 = vrot.slane %v49, %v57
    %61 = vmatprep.subr.mxu0 %v48
    %62 = vmatpush1.msra.mxu0 %v47
    %63 = vmatprep.subr.mxu0 %v46
    %64 = vmatpush1.msra.mxu0 %v45
    %65 = vmatprep.subr.mxu0 %v44
    %66 = vmatpush1.msra.mxu0 %v43
    %67 = vmatprep.subr.mxu0 %v42
    %68 = vmatpush1.msra.mxu0 %v41
    %69 = vmatprep.subr.mxu0 %v40
    %70 = vmatpush1.msra.mxu0 %v39
    %71 = vmatprep.subr.mxu0 %v38
    %72 = vmatpush1.msra.mxu0 %v37
    %73 = vmatprep.subr.mxu0 %v36
    %74 = vmatpush1.msra.mxu0 %v35
    %75 = vmatprep.subr.mxu0 %v34
    %76 = vmatpush1.msra.mxu0 %v33
    %77 = vmatprep.subr.mxu0 %v32
    %78 = vmatpush1.msra.mxu0 %v31
    %79 = vmatprep.subr.mxu0 %v30
    %80 = vmatpush1.msra.mxu0 %v29
    %81 = vmatprep.subr.mxu0 %v28
    %82 = vmatpush1.msra.mxu0 %v27
    %83 = vmatprep.subr.mxu0 %v26
    %84 = vmatpush1.msra.mxu0 %v25
    %85 = vmatprep.subr.mxu0 %v24
    %86 = vmatpush1.msra.mxu0 %v23
    %87 = vmatprep.subr.mxu0 %v22
    %88 = vmatpush1.msra.mxu0 %v21
    %89 = vmatprep.subr.mxu0 %v20
    %90 = vmatpush1.msra.mxu0 %v19
    %91 = vmatprep.subr.mxu0 %v18
    %92 = vmatpush1.msra.mxu0 %v17
    %93 = vmatprep.subr.mxu0 0.0
    %94 = vmatpush2.msra.mxu0 0.0
    %95 = vmatprep.subr.mxu0 0.0
    %96 = vmatpush2.msra.mxu0 0.0
    %97 = vmatprep.subr.mxu0 0.0
    %98 = vmatpush2.msra.mxu0 0.0
    %99 = vmatprep.subr.mxu0 0.0
    %100 = vmatpush2.msra.mxu0 0.0
    %101 = vmatprep.subr.mxu0 0.0
    %102 = vmatpush2.msra.mxu0 0.0
    %103 = vmatprep.subr.mxu0 0.0
    %104 = vmatpush2.msra.mxu0 0.0
    %105 = vmatprep.subr.mxu0 0.0
    %106 = vmatpush2.msra.mxu0 0.0
    %107 = vmatprep.subr.mxu0 0.0
    %108 = vmatpush2.msra.mxu0 0.0
    %109 = vmatprep.subr.mxu0 0.0
    %110 = vmatpush2.msra.mxu0 0.0
    %111 = vmatprep.subr.mxu0 0.0
    %112 = vmatpush2.msra.mxu0 0.0
    %113 = vmatprep.subr.mxu0 0.0
    %114 = vmatpush2.msra.mxu0 0.0
    %115 = vmatprep.subr.mxu0 0.0
    %116 = vmatpush2.msra.mxu0 0.0
    %117 = vmatprep.subr.mxu0 0.0
    %118 = vmatpush2.msra.mxu0 0.0
    %119 = vmatprep.subr.mxu0 0.0
    %120 = vmatpush2.msra.mxu0 0.0
    %121 = vmatprep.subr.mxu0 0.0
    %122 = vmatpush2.msra.mxu0 0.0
    %123 = vmatprep.subr.mxu0 0.0
    %124 = vmatpush2.msra.mxu0 0.0
    %125 = vmatprep.mubr.f32.mxu0 0.0
    %126 = vmatmul.mubr.f32.gmra.mxu0 %v15
    %v127 = vpop.f32.mrf.mxu0
    %v128 = vadd.f32 %v54, %v127
    %v129 = vpop.f32.mrf.mxu0
    %v130 = vadd.f32 %v58, %v129
    %131 = vmatprep.mubr.f32.mxu0 0.0
    %132 = vmatmul.mubr.f32.gmra.mxu0 %v16
    %v133 = vpop.f32.mrf.mxu0
    %v134 = vadd.f32 %v54, %v133
    %v135 = vpop.f32.mrf.mxu0
    %v136 = vadd.f32 %v58, %v135
    %137 = vdwg.mxu0
    %v138 = vmax.f32 %v128, 0.0
    %v139 = vmax.f32 %v134, 0.0
    %v140 = vxor.u32 %v130, 2147483648
    %v141 = vxor.u32 %v136, 2147483648
    %v142 = vmul.f32 %v140, 1.442695
    %v143 = vpow.pop %v142
    %v144 = vmul.f32 %v141, 1.442695
    %v145 = vpow.pop %v144
    %v146 = vadd.f32 %v143, 1.0
    %v147 = vadd.f32 %v145, 1.0
    %v148 = vrcp.pop %v146
    %v149 = vmul.f32 1.0, %v148
    %v150 = vrcp.pop %v147
    %v151 = vmul.f32 1.0, %v150
    %v152 = vsub.f32 %v138, %v15
    %v153 = vsub.f32 %v139, %v16
    %v154 = vmul.f32 %v149, %v152
    %v155 = vmul.f32 %v151, %v153
    %v156 = vadd.f32 %v15, %v154
    %v157 = vadd.f32 %v16, %v155
    %158 = vst [vmem:[#allocation2] sm:$0xff] %v156
    %159 = vst [vmem:[#allocation2 + $0x8] sm:$0xff] %v157
    // Predicated region
    $region14: #{highway.1} parent=1 // pred_check
      _
    $region15: #{highway.1} parent=1 // pred_check_branch
      %161 = sbr.rel (0) target = $region17
    $region16: #{highway.1} parent=1 // pred_region
      %s163 = ssub.s32 256, 256
      %164 = vsyncadd [#allocation3], %s163
      %s165 = sshll.u32 [#allocation2], 4
      %s166 = int_to_ptr.vmem [resolvable:$true] %s165
      %171 = dma.vmem_to_hbm [thread:$0]  %s166, 256, %s3, [#allocation3], 128, 128, 8
    $region17: #{highway.1} parent=1 // pred_fallthru
      _
    // Predicated region
    $region18: #{highway.1} parent=1 // pred_check
      _
    $region19: #{highway.1} parent=1 // pred_check_branch
      %173 = sbr.rel (0) target = $region21
    $region20: #{highway.1} parent=1 // pred_region
      %174 = dma.done [#allocation3], 256
    $region21: #{highway.1} parent=1 // pred_fallthru
      _
    %175 = vsyncpa [#allocation3], 1

</llo_original>
